<compile_context>
chip_gen: v7x
topology: tpu7x:2x2x1
jax: 0.10.0
libtpu: 0.0.40
codegen_flags: <defaults>
</compile_context>

<pallas_src>
import functools

import jax
import jax.numpy as jnp
from jax import lax
from jax.experimental import pallas as pl
from jax.experimental.pallas import tpu as pltpu

_EPS = 1e-12  # torch.nn.functional.normalize default eps

# Abramowitz & Stegun 4.4.46: arcsin(z) = pi/2 - sqrt(1 - z) * poly(z), z in [0, 1].
# |error| <= 2e-8 — plenty for an fp32 loss term; uses only sqrt/mul/add.
_ASIN_COEFFS = (
    1.5707963050, -0.2145988016, 0.0889789874, -0.0501743046,
    0.0308918810, -0.0170881256, 0.0066700901, -0.0012624911,
)


def _round_up(x, m):
    return ((x + m - 1) // m) * m


def _asin01(z):
    """arcsin on [0, 1] via the A&S 4.4.46 polynomial."""
    poly = _ASIN_COEFFS[-1]
    for c in reversed(_ASIN_COEFFS[:-1]):
        poly = poly * z + c
    return (jnp.pi / 2) - jnp.sqrt(1.0 - z) * poly


def _prompt_psum_kernel(x_ref, ent_ref, psum_ref, *, n_rows, n_cols):
    """One row-tile of the Prompt loss.

    x_ref:    (tn, D)     un-normalized input rows (bf16 or f32), streamed
    ent_ref:  (D, m_pad)  pre-normalized, pre-transposed embed (VMEM-resident)
    psum_ref: (8, m_pad)  partial sums of 2*arcsin(d/2)^2 reduced over 8-row
                          groups; padded rows / lanes are masked to 0
    """
    tn = x_ref.shape[0]
    m_pad = ent_ref.shape[1]

    # Row-normalize x: rsqrt goes to the EUP (its own VLIW slot), no divide.
    x = x_ref[...].astype(jnp.float32)
    xn = x * lax.rsqrt(jnp.maximum(jnp.sum(x * x, axis=-1, keepdims=True),
                                   _EPS * _EPS))

    # Gram identity on the MXU (contract over D): s_ij = <xn_i, en_j>.
    s = lax.dot_general(xn.astype(x_ref.dtype), ent_ref[...],
                        (((1,), (0,)), ((), ())),
                        preferred_element_type=jnp.float32)        # (tn, m_pad)

    # ||xn_i - en_j|| = sqrt(2 - 2 s); dists = 2 * arcsin(d / 2)^2.
    d = jnp.sqrt(jnp.maximum(2.0 - 2.0 * s, 0.0))
    z = jnp.minimum(d * 0.5, 1.0)
    asin = _asin01(z)
    dists = 2.0 * asin * asin

    # Mask padded embed lanes and (for a ragged last tile) out-of-range rows.
    # `where` kills any NaN/Inf coming from out-of-bounds garbage rows.
    mask = None
    if n_cols != m_pad:
        mask = lax.broadcasted_iota(jnp.int32, dists.shape, 1) < n_cols
    if n_rows % tn != 0:
        rows = pl.program_id(0) * tn + lax.broadcasted_iota(jnp.int32, dists.shape, 0)
        rmask = rows < n_rows
        mask = rmask if mask is None else (mask & rmask)
    if mask is not None:
        dists = jnp.where(mask, dists, 0.0)

    # Reduce 8-row groups -> lane-dense (8, m_pad) partial sums (tiny writeback).
    acc = dists[0:8, :]
    for g in range(1, tn // 8):
        acc = acc + dists[g * 8:(g + 1) * 8, :]
    psum_ref[...] = acc


def _estimate_vmem_bytes(tn, d, m_pad, stream_bytes):
    x_stream = 2 * tn * d * stream_bytes        # double-buffered x tiles
    e_res = 2 * d * m_pad * stream_bytes        # resident embed^T buffers
    out_db = 2 * 8 * m_pad * 4                  # double-buffered partial sums
    temps = tn * d * 8 + tn * m_pad * 20        # fp32 body temporaries (rough)
    return x_stream + e_res + out_db + temps


def _choose_tn(n, d, m_pad, stream_bytes, *, max_tn=512,
               budget_bytes=12 * 1024 * 1024):
    tn = min(max_tn, _round_up(n, 8))
    while tn > 8 and _estimate_vmem_bytes(tn, d, m_pad, stream_bytes) > budget_bytes:
        tn = max(8, _round_up(tn // 2, 8))
    if n > 8 and pl.cdiv(n, tn) < 2:
        # Split the single tile so the grid has 2 "parallel" steps and the
        # second v7x TensorCore does not idle.
        tn = _round_up(pl.cdiv(n, 2), 8)
    return max(tn, 8)


def prompt_forward(inp, embed, weight=1.0, stop=float("-inf"), *,
                   precision="bf16", max_tn=512):
    """Forward pass of Prompt."""
    # TODO(synk): ReplaceGrad / the `stop` clamp only affect the backward pass
    # (forward is identity), so `stop` is unused in this forward-only kernel.
    del stop
    n, d = inp.shape
    m, d2 = embed.shape
    assert d == d2, (inp.shape, embed.shape)

    stream_dtype = jnp.bfloat16 if precision == "bf16" else jnp.float32
    stream_bytes = jnp.dtype(stream_dtype).itemsize

    # Lane-dense embed width: 256-aligned once the matmul N-dim matters
    # (v6e/v7x MXUs are 256 wide); 128 keeps padding minimal for tiny M.
    m_pad = _round_up(m, 256 if m > 128 else 128)

    # Normalize the embed ONCE here (exact torch semantics v / max(||v||, eps)),
    # zero-pad to m_pad rows (zero rows stay zero) and pre-transpose to (D, m_pad).
    en = embed.astype(jnp.float32)
    en = en / jnp.maximum(jnp.linalg.norm(en, axis=-1, keepdims=True), _EPS)
    if m_pad != m:
        en = jnp.pad(en, ((0, m_pad - m), (0, 0)))
    ent = en.T.astype(stream_dtype)                      # (D, m_pad)

    # Stream x in the compute dtype. No full tile padding: only align the row
    # count to the 8-sublane tile so a block never exceeds the array; ragged
    # last tiles are handled by the in-kernel row mask.
    xs = inp.astype(stream_dtype)
    n_aligned = _round_up(n, 8)
    if n_aligned != n:
        xs = jnp.pad(xs, ((0, n_aligned - n), (0, 0)))

    tn = _choose_tn(n, d, m_pad, stream_bytes, max_tn=max_tn)
    num_tiles = pl.cdiv(n, tn)

    kernel = functools.partial(_prompt_psum_kernel, n_rows=n, n_cols=m)

    psum = pl.pallas_call(
        kernel,
        out_shape=jax.ShapeDtypeStruct((8 * num_tiles, m_pad), jnp.float32),
        grid_spec=pltpu.PrefetchScalarGridSpec(
            num_scalar_prefetch=0,
            grid=(num_tiles,),
            in_specs=[
                pl.BlockSpec((tn, d), lambda i: (i, 0)),      # x: streamed row tiles
                pl.BlockSpec((d, m_pad), lambda i: (0, 0)),   # embed^T: VMEM-resident
            ],
            out_specs=pl.BlockSpec((8, m_pad), lambda i: (i, 0)),
        ),
        compiler_params=pltpu.CompilerParams(
            dimension_semantics=("parallel",),                # megacore sharding
            vmem_limit_bytes=32 * 1024 * 1024,
        ),
    )(xs, ent)

    w = jnp.asarray(weight, dtype=jnp.float32)
    mean_dists = jnp.sum(psum) / (n * m)
    return jnp.abs(w) * (jnp.sign(w) * mean_dists)


def _reference(inp, embed, weight):
    """Pure-JAX reference mirroring the PyTorch forward (broadcast-subtract form)."""
    xn = inp / jnp.maximum(jnp.linalg.norm(inp, axis=-1, keepdims=True), _EPS)
    en = embed / jnp.maximum(jnp.linalg.norm(embed, axis=-1, keepdims=True), _EPS)
    d = jnp.linalg.norm(xn[:, None, :] - en[None, :, :], axis=-1)
    dists = 2.0 * jnp.arcsin(d * 0.5) ** 2 * jnp.sign(weight)
    return jnp.abs(weight) * jnp.mean(dists)


if __name__ == "__main__":
    key = jax.random.PRNGKey(0)
    k_in, k_emb = jax.random.split(key)

    # input: batch of (cutout) embeddings, embed: prompt embeddings (buffer).
    N, M, D = 16, 8, 128
    x = jax.random.normal(k_in, (N, D), dtype=jnp.float32)
    embed = jax.random.normal(k_emb, (M, D), dtype=jnp.float32)
    weight = 1.0
    stop = float("-inf")

    ref = _reference(x, embed, jnp.float32(weight))

    # fp32 path: tight check against the broadcast-subtract reference.
    out_fp32 = jax.block_until_ready(
        prompt_forward(x, embed, weight, stop, precision="fp32"))
    assert out_fp32.shape == (), out_fp32.shape
    assert jnp.allclose(out_fp32, ref, atol=1e-4, rtol=1e-4), (out_fp32, ref)

    # Default path: bf16 streaming + bf16 MXU operands, f32 accumulate.
    out = jax.block_until_ready(prompt_forward(x, embed, weight, stop))
    assert out.shape == (), out.shape
    assert jnp.allclose(out, ref, atol=2e-2, rtol=2e-2), (out, ref)

    print("KERNEL_OK")
</pallas_src>

<mosaic_0001>
module attributes {stable_mosaic.version = 11 : i64} {
  func.func @_prompt_psum_kernel(%arg0: i32, %arg1: memref<8x128xf32, #tpu.memory_space<vmem>>, %arg2: memref<128x128xf32, #tpu.memory_space<vmem>>, %arg3: memref<8x128xf32, #tpu.memory_space<vmem>>) attributes {dimension_semantics = [#tpu.dimension_semantics<parallel>], iteration_bounds = array<i64: 2>, scalar_prefetch = 0 : i64, scratch_operands = 0 : i64, tpu.core_type = #tpu.core_type<tc>, window_params = [{transform_indices = @transform_0, window_bounds = array<i64: 8, 128>}, {pipeline_mode = #tpu.pipeline_mode<synchronous>, transform_indices = @transform_1, window_bounds = array<i64: 128, 128>}, {transform_indices = @transform_2, window_bounds = array<i64: 8, 128>}]} {
    %c0 = arith.constant 0 : index
    %c0_0 = arith.constant 0 : index
    %0 = vector.load %arg1[%c0, %c0_0] : memref<8x128xf32, #tpu.memory_space<vmem>>, vector<8x128xf32>
    %1 = arith.mulf %0, %0 : vector<8x128xf32>
    %cst = arith.constant dense<0.000000e+00> : vector<8xf32>
    %2 = vector.multi_reduction <add>, %1, %cst [1] : vector<8x128xf32> to vector<8xf32>
    %3 = vector.shape_cast %2 : vector<8xf32> to vector<8x1xf32>
    %cst_1 = arith.constant 1.000000e-24 : f32
    %4 = vector.broadcast %cst_1 : f32 to vector<8x1xf32>
    %5 = arith.maximumf %3, %4 : vector<8x1xf32>
    %6 = math.rsqrt %5 : vector<8x1xf32>
    %7 = vector.broadcast %6 : vector<8x1xf32> to vector<8x128xf32>
    %8 = arith.mulf %0, %7 : vector<8x128xf32>
    %c0_2 = arith.constant 0 : index
    %c0_3 = arith.constant 0 : index
    %9 = vector.load %arg2[%c0_2, %c0_3] : memref<128x128xf32, #tpu.memory_space<vmem>>, vector<128x128xf32>
    %cst_4 = arith.constant dense<0.000000e+00> : vector<8x128xf32>
    %10 = tpu.matmul %8, %9, %cst_4 {dimension_numbers = #tpu.dot_dimension_numbers<[1], [0], [0], [1], [0, 0, 1, 1], [], []>} : vector<8x128xf32>, vector<128x128xf32>, vector<8x128xf32> -> vector<8x128xf32>
    %cst_5 = arith.constant 2.000000e+00 : f32
    %11 = vector.broadcast %cst_5 : f32 to vector<8x128xf32>
    %12 = arith.mulf %11, %10 : vector<8x128xf32>
    %cst_6 = arith.constant 2.000000e+00 : f32
    %13 = vector.broadcast %cst_6 : f32 to vector<8x128xf32>
    %14 = arith.subf %13, %12 : vector<8x128xf32>
    %cst_7 = arith.constant 0.000000e+00 : f32
    %15 = vector.broadcast %cst_7 : f32 to vector<8x128xf32>
    %16 = arith.maximumf %14, %15 : vector<8x128xf32>
    %17 = math.sqrt %16 : vector<8x128xf32>
    %cst_8 = arith.constant 5.000000e-01 : f32
    %18 = vector.broadcast %cst_8 : f32 to vector<8x128xf32>
    %19 = arith.mulf %17, %18 : vector<8x128xf32>
    %cst_9 = arith.constant 1.000000e+00 : f32
    %20 = vector.broadcast %cst_9 : f32 to vector<8x128xf32>
    %21 = arith.minimumf %19, %20 : vector<8x128xf32>
    %cst_10 = arith.constant -0.0012624911 : f32
    %22 = vector.broadcast %cst_10 : f32 to vector<8x128xf32>
    %23 = arith.mulf %22, %21 : vector<8x128xf32>
    %cst_11 = arith.constant 6.670090e-03 : f32
    %24 = vector.broadcast %cst_11 : f32 to vector<8x128xf32>
    %25 = arith.addf %23, %24 : vector<8x128xf32>
    %26 = arith.mulf %25, %21 : vector<8x128xf32>
    %cst_12 = arith.constant -0.0170881264 : f32
    %27 = vector.broadcast %cst_12 : f32 to vector<8x128xf32>
    %28 = arith.addf %26, %27 : vector<8x128xf32>
    %29 = arith.mulf %28, %21 : vector<8x128xf32>
    %cst_13 = arith.constant 0.0308918804 : f32
    %30 = vector.broadcast %cst_13 : f32 to vector<8x128xf32>
    %31 = arith.addf %29, %30 : vector<8x128xf32>
    %32 = arith.mulf %31, %21 : vector<8x128xf32>
    %cst_14 = arith.constant -0.0501743034 : f32
    %33 = vector.broadcast %cst_14 : f32 to vector<8x128xf32>
    %34 = arith.addf %32, %33 : vector<8x128xf32>
    %35 = arith.mulf %34, %21 : vector<8x128xf32>
    %cst_15 = arith.constant 0.0889789909 : f32
    %36 = vector.broadcast %cst_15 : f32 to vector<8x128xf32>
    %37 = arith.addf %35, %36 : vector<8x128xf32>
    %38 = arith.mulf %37, %21 : vector<8x128xf32>
    %cst_16 = arith.constant -0.214598805 : f32
    %39 = vector.broadcast %cst_16 : f32 to vector<8x128xf32>
    %40 = arith.addf %38, %39 : vector<8x128xf32>
    %41 = arith.mulf %40, %21 : vector<8x128xf32>
    %cst_17 = arith.constant 1.57079625 : f32
    %42 = vector.broadcast %cst_17 : f32 to vector<8x128xf32>
    %43 = arith.addf %41, %42 : vector<8x128xf32>
    %cst_18 = arith.constant 1.000000e+00 : f32
    %44 = vector.broadcast %cst_18 : f32 to vector<8x128xf32>
    %45 = arith.subf %44, %21 : vector<8x128xf32>
    %46 = math.sqrt %45 : vector<8x128xf32>
    %47 = arith.mulf %46, %43 : vector<8x128xf32>
    %cst_19 = arith.constant 1.57079637 : f32
    %48 = vector.broadcast %cst_19 : f32 to vector<8x128xf32>
    %49 = arith.subf %48, %47 : vector<8x128xf32>
    %cst_20 = arith.constant 2.000000e+00 : f32
    %50 = vector.broadcast %cst_20 : f32 to vector<8x128xf32>
    %51 = arith.mulf %50, %49 : vector<8x128xf32>
    %52 = arith.mulf %51, %49 : vector<8x128xf32>
    %53 = tpu.iota {dimensions = array<i32: 1>} : vector<8x128xi32>
    %c8_i32 = arith.constant 8 : i32
    %54 = vector.broadcast %c8_i32 : i32 to vector<8x128xi32>
    %55 = arith.cmpi slt, %53, %54 : vector<8x128xi32>
    %cst_21 = arith.constant 0.000000e+00 : f32
    %56 = vector.broadcast %cst_21 : f32 to vector<8x128xf32>
    %57 = arith.select %55, %52, %56 : vector<8x128xi1>, vector<8x128xf32>
    %c0_22 = arith.constant 0 : index
    %c0_23 = arith.constant 0 : index
    %58 = vector.load %arg3[%c0_22, %c0_23] : memref<8x128xf32, #tpu.memory_space<vmem>>, vector<8x128xf32>
    tpu.vector_store %arg3[%c0_22, %c0_23], %57 {strides = array<i32>} : memref<8x128xf32, #tpu.memory_space<vmem>>, vector<8x128xf32>,
    return
  }
  func.func @transform_0(%arg0: i32) -> (i32, i32) {
    %c0_i32 = arith.constant 0 : i32
    %c0_i32_0 = arith.constant 0 : i32
    return %arg0, %c0_i32 : i32, i32
  }
  func.func @transform_1(%arg0: i32) -> (i32, i32) {
    %c0_i32 = arith.constant 0 : i32
    %c0_i32_0 = arith.constant 0 : i32
    %c0_i32_1 = arith.constant 0 : i32
    return %c0_i32, %c0_i32_0 : i32, i32
  }
  func.func @transform_2(%arg0: i32) -> (i32, i32) {
    %c0_i32 = arith.constant 0 : i32
    %c0_i32_0 = arith.constant 0 : i32
    return %arg0, %c0_i32 : i32, i32
  }
}

</mosaic_0001>

<llo_original>
// kernel: tpu_custom_call.1
$region0: #{tpu_custom_call.1}
  #allocation0 [shape = 'u32[]', space=smem, size = 0x4, offset = 0x4, fixed_abs, tag = 'smem constant byte address 0x4 - core index']
  #allocation1 [shape = 'u32[144,128]{1,0:T(1,128)}', space=vmem, size = 0x12000, scoped, tag = 'internal scratch']
  %s0 = inlined_call_operand.hbm [shape: f32[16,128], index: 0, kind: input, shape index: {}]
  %s1 = inlined_call_operand.hbm [shape: f32[128,128], index: 1, kind: input, shape index: {}]
  %s2 = inlined_call_operand.hbm [shape: f32[16,128], index: 2, kind: output, shape index: {}]
  %s3 = sld [smem:[#allocation0]]
  $region49: #{tpu_custom_call.1} parent=0
    _
  %s5 = ssub.s32 1, %s3
  %s6 = scalar_select 0, %s5, %s3
  $region1: #{tpu_custom_call.1} parent=0
    #allocation2 [shape = 'u8[8192]{0}', space=vmem, size = 0x2000, scoped, tag = 'input window, operand 0']
    #allocation3 [shape = 's32[2]{0}', space=sflag, size = 0x8, scoped, tag = 'scoped memory for tpu_custom_call.1']
    #allocation4 [shape = 's32[2]{0}', space=sflag, size = 0x8, scoped, tag = 'scoped memory for tpu_custom_call.1']
    #allocation5 [shape = 'u8[65536]{0}', space=vmem, size = 0x10000, scoped, tag = 'input window, operand 1, single buffered']
    #allocation6 [shape = 's32[1]{0}', space=sflag, size = 0x4, scoped, tag = 'scoped memory for tpu_custom_call.1']
    #allocation7 [shape = 'u8[8192]{0}', space=vmem, size = 0x2000, scoped, tag = 'output window, operand 0']
    %7 = vsyncpa [#allocation3], 0
    %s8 = scalar_lea.sflag [#allocation3], 1
    %9 = vsyncpa %s8, 0
    %10 = vsyncpa [#allocation6], 0
    %11 = vsyncpa [#allocation4], 0
    %s12 = scalar_lea.sflag [#allocation4], 1
    %13 = vsyncpa %s12, 0
    loop: start=0, step=1, limit=4
    $region2: #{tpu_custom_call.1} parent=1 // loop_pre_header
      _
    $region3: #{tpu_custom_call.1} parent=1 // loop_header
      %s15 = sphi 0, %s19
      %p16 = scmp.ge.s32.totalorder %s15, 4
      %s25 = sphi 0, %s27
      %s28 = sphi 0, %s25
      %s29 = sphi 0, %s28
      %s45 = sphi 0, %s29
      %s49 = sphi 0, %s49
      %s51 = sphi 0, %s49
      %s52 = sphi 0, %s51
      %s66 = sphi 0, %s52
      %s72 = sphi 0, %s74
      %s75 = sphi 0, %s72
      %s76 = sphi 0, %s75
      %s92 = sphi 0, %s76
    $region4: #{tpu_custom_call.1} parent=1 // loop_header_branch
      %18 = sbr.rel (%p16) target = $region8
    $region5: #{tpu_custom_call.1} parent=1 // loop_body
      %s20 = ssub.s32 %s15, 1
      %s21 = ssub.s32 %s15, 2
      %s22 = sadd.s32 %s15, 1
      %s23 = ssub.s32 %s15, %s22
      %p24 = scmp.eq.s32.totalorder %s23, 0
      %s26 = sadd.s32 %s25, 1
      %s27 = scalar_select %p24, %s25, %s26
      %p30 = pneg %p24
      %p31 = scmp.eq.s32.totalorder %s15, 1
      %p32 = por %p30, %p31
      %p33 = scmp.ne.s32.totalorder %s25, %s28
      %p34 = scmp.eq.s32.totalorder %s15, 0
      %p35 = por %p33, %p34
      %p36 = scmp.ne.s32.totalorder %s25, %s28
      %p37 = scmp.eq.s32.totalorder %s20, 1
      %p38 = por %p36, %p37
      %p39 = scmp.ne.s32.totalorder %s28, %s29
      %p40 = scmp.eq.s32.totalorder %s20, 0
      %p41 = por %p39, %p40
      %p42 = scmp.ne.s32.totalorder %s28, %s29
      %p43 = scmp.eq.s32.totalorder %s21, 1
      %p44 = por %p42, %p43
      %p46 = scmp.ne.s32.totalorder %s29, %s45
      %p47 = scmp.eq.s32.totalorder %s21, 0
      %p48 = por %p46, %p47
      %s50 = sadd.s32 %s49, 1
      %p53 = scmp.eq.s32.totalorder %s15, 1
      %p54 = scmp.ne.s32.totalorder %s49, %s51
      %p55 = scmp.eq.s32.totalorder %s15, 0
      %p56 = por %p54, %p55
      %p57 = scmp.ne.s32.totalorder %s49, %s51
      %p58 = scmp.eq.s32.totalorder %s20, 1
      %p59 = por %p57, %p58
      %p60 = scmp.ne.s32.totalorder %s51, %s52
      %p61 = scmp.eq.s32.totalorder %s20, 0
      %p62 = por %p60, %p61
      %p63 = scmp.ne.s32.totalorder %s51, %s52
      %p64 = scmp.eq.s32.totalorder %s21, 1
      %p65 = por %p63, %p64
      %p67 = scmp.ne.s32.totalorder %s52, %s66
      %p68 = scmp.eq.s32.totalorder %s21, 0
      %p69 = por %p67, %p68
      %s70 = ssub.s32 %s15, %s22
      %p71 = scmp.eq.s32.totalorder %s70, 0
      %s73 = sadd.s32 %s72, 1
      %s74 = scalar_select %p71, %s72, %s73
      %p77 = pneg %p71
      %p78 = scmp.eq.s32.totalorder %s15, 1
      %p79 = por %p77, %p78
      %p80 = scmp.ne.s32.totalorder %s72, %s75
      %p81 = scmp.eq.s32.totalorder %s15, 0
      %p82 = por %p80, %p81
      %p83 = scmp.ne.s32.totalorder %s72, %s75
      %p84 = scmp.eq.s32.totalorder %s20, 1
      %p85 = por %p83, %p84
      %p86 = scmp.ne.s32.totalorder %s75, %s76
      %p87 = scmp.eq.s32.totalorder %s20, 0
      %p88 = por %p86, %p87
      %p89 = scmp.ne.s32.totalorder %s75, %s76
      %p90 = scmp.eq.s32.totalorder %s21, 1
      %p91 = por %p89, %p90
      %p93 = scmp.ne.s32.totalorder %s76, %s92
      %p94 = scmp.eq.s32.totalorder %s21, 0
      %p95 = por %p93, %p94
      %p96 = scmp.le.s32.totalorder 1, %s15
      %p97 = scmp.lt.s32.totalorder %s15, 3
      %p98 = pnand %p96, %p97
      %p99 = pneg %p98
      // Predicated region
      $region9: #{tpu_custom_call.1} parent=5 // pred_check
        _
      $region10: #{tpu_custom_call.1} parent=5 // pred_check_branch
        %101 = sbr.rel (%p98) target = $region12
      $region11: #{tpu_custom_call.1} parent=5 // pred_region
        %s102 = ssub.s32 %s15, 1
        // Predicated region
        $region13: #{tpu_custom_call.1} parent=11 // pred_check
          %p103 = pneg %p62
        $region14: #{tpu_custom_call.1} parent=11 // pred_check_branch
          %105 = sbr.rel (%p103) target = $region16
        $region15: #{tpu_custom_call.1} parent=11 // pred_region
          %s107 = ssub.s32 2048, 2048
          %108 = vsyncadd [#allocation6], %s107
          %s109 = sshll.u32 [#allocation5], 4
          %s110 = int_to_ptr.vmem [resolvable:$true] %s109
          %115 = dma.hbm_to_vmem [thread:$0]  %s1, 2048, %s110, [#allocation6], 128, 128, 8
        $region16: #{tpu_custom_call.1} parent=11 // pred_fallthru
          _
      $region12: #{tpu_custom_call.1} parent=5 // pred_fallthru
        _
      %p116 = scmp.lt.s32.totalorder %s15, 2
      // Predicated region
      $region17: #{tpu_custom_call.1} parent=5 // pred_check
        %p117 = pneg %p116
      $region18: #{tpu_custom_call.1} parent=5 // pred_check_branch
        %119 = sbr.rel (%p117) target = $region20
      $region19: #{tpu_custom_call.1} parent=5 // pred_region
        // Predicated region
        $region21: #{tpu_custom_call.1} parent=19 // pred_check
          %p120 = pneg %p35
        $region22: #{tpu_custom_call.1} parent=19 // pred_check_branch
          %122 = sbr.rel (%p120) target = $region24
        $region23: #{tpu_custom_call.1} parent=19 // pred_region
          %s123 = sand.u32 %s25, 1
          %s124 = scalar_lea.sflag [#allocation3], %s123
          %s125 = sand.u32 %s25, 1
          %s126 = smul.addr %s125, 8
          %s127 = scalar_lea.vmem [#allocation2], %s126
          %s129 = ssub.s32 128, 128
          %130 = vsyncadd %s124, %s129
          %s131 = smul.addr %s15, 128
          %s132 = scalar_lea.hbm %s0, %s131
          %s134 = sshll.u32 %s127, 4
          %s135 = int_to_ptr.vmem [resolvable:$true] %s134
          %137 = dma.hbm_to_vmem [thread:$0]  %s132, 128, %s135, %s124
        $region24: #{tpu_custom_call.1} parent=19 // pred_fallthru
          _
      $region20: #{tpu_custom_call.1} parent=5 // pred_fallthru
        _
      %p138 = scmp.le.s32.totalorder 1, %s15
      %p139 = scmp.lt.s32.totalorder %s15, 3
      %p140 = pnand %p138, %p139
      %p141 = pneg %p140
      // Predicated region
      $region25: #{tpu_custom_call.1} parent=5 // pred_check
        _
      $region26: #{tpu_custom_call.1} parent=5 // pred_check_branch
        %143 = sbr.rel (%p140) target = $region28
      $region27: #{tpu_custom_call.1} parent=5 // pred_region
        %s144 = ssub.s32 %s15, 1
        %s145 = sand.u32 %s28, 1
        %s146 = scalar_lea.sflag [#allocation3], %s145
        %s147 = sand.u32 %s28, 1
        %s148 = smul.addr %s147, 8
        %s149 = scalar_lea.vmem [#allocation2], %s148
        // Predicated region
        $region29: #{tpu_custom_call.1} parent=27 // pred_check
          %p150 = pneg %p41
        $region30: #{tpu_custom_call.1} parent=27 // pred_check_branch
          %152 = sbr.rel (%p150) target = $region32
        $region31: #{tpu_custom_call.1} parent=27 // pred_region
          %153 = dma.done %s146, 128
        $region32: #{tpu_custom_call.1} parent=27 // pred_fallthru
          _
        // Predicated region
        $region33: #{tpu_custom_call.1} parent=27 // pred_check
          %p154 = pneg %p62
        $region34: #{tpu_custom_call.1} parent=27 // pred_check_branch
          %156 = sbr.rel (%p154) target = $region36
        $region35: #{tpu_custom_call.1} parent=27 // pred_region
          %157 = dma.done [#allocation6], 2048
        $region36: #{tpu_custom_call.1} parent=27 // pred_fallthru
          _
        %s158 = sand.u32 %s28, 1
        %s159 = scalar_lea.sflag [#allocation3], %s158
        %s160 = sand.u32 %s28, 1
        %s161 = smul.addr %s160, 8
        %s162 = scalar_lea.vmem [#allocation2], %s161
        %p163 = pneg %p41
        %p164 = pneg %p38
        %p165 = pneg %p62
        %p166 = pneg %p59
        %p167 = pneg %p88
        %p168 = pneg %p85
        %s169 = sand.u32 %s75, 1
        %s170 = scalar_lea.sflag [#allocation4], %s169
        %s171 = sand.u32 %s75, 1
        %s172 = smul.addr %s171, 8
        %s173 = scalar_lea.vmem [#allocation7], %s172
        %v174 = vld [vmem:[%s149] sm:$0xff]
        %v175 = vmul.f32 %v174, %v174
        %176 = vadd.xlane.f32.xlu0 %v175
        %v177 = vpop.xlane.xlu0 %176
        %v178 = vmax.f32 %v177, 1e-24
        %v179 = vrsqrt.pop %v178
        %v180 = vmul.f32 %v174, %v179
        %v181 = vld [vmem:[#allocation5] sm:$0xff]
        %v182 = vld [vmem:[#allocation5 + $0x8] sm:$0xff]
        %v183 = vld [vmem:[#allocation5 + $0x10] sm:$0xff]
        %v184 = vld [vmem:[#allocation5 + $0x18] sm:$0xff]
        %v185 = vld [vmem:[#allocation5 + $0x20] sm:$0xff]
        %v186 = vld [vmem:[#allocation5 + $0x28] sm:$0xff]
        %v187 = vld [vmem:[#allocation5 + $0x30] sm:$0xff]
        %v188 = vld [vmem:[#allocation5 + $0x38] sm:$0xff]
        %v189 = vld [vmem:[#allocation5 + $0x40] sm:$0xff]
        %v190 = vld [vmem:[#allocation5 + $0x48] sm:$0xff]
        %v191 = vld [vmem:[#allocation5 + $0x50] sm:$0xff]
        %v192 = vld [vmem:[#allocation5 + $0x58] sm:$0xff]
        %v193 = vld [vmem:[#allocation5 + $0x60] sm:$0xff]
        %v194 = vld [vmem:[#allocation5 + $0x68] sm:$0xff]
        %v195 = vld [vmem:[#allocation5 + $0x70] sm:$0xff]
        %v196 = vld [vmem:[#allocation5 + $0x78] sm:$0xff]
        %197 = vmatprep.subr.mxu0 0.0
        %198 = vmatpush1.msra.mxu0 %v181
        %199 = vmatprep.subr.mxu0 0.0
        %200 = vmatpush1.msra.mxu0 %v182
        %201 = vmatprep.subr.mxu0 0.0
        %202 = vmatpush1.msra.mxu0 %v183
        %203 = vmatprep.subr.mxu0 0.0
        %204 = vmatpush1.msra.mxu0 %v184
        %205 = vmatprep.subr.mxu0 0.0
        %206 = vmatpush1.msra.mxu0 %v185
        %207 = vmatprep.subr.mxu0 0.0
        %208 = vmatpush1.msra.mxu0 %v186
        %209 = vmatprep.subr.mxu0 0.0
        %210 = vmatpush1.msra.mxu0 %v187
        %211 = vmatprep.subr.mxu0 0.0
        %212 = vmatpush1.msra.mxu0 %v188
        %213 = vmatprep.subr.mxu0 0.0
        %214 = vmatpush1.msra.mxu0 %v189
        %215 = vmatprep.subr.mxu0 0.0
        %216 = vmatpush1.msra.mxu0 %v190
        %217 = vmatprep.subr.mxu0 0.0
        %218 = vmatpush1.msra.mxu0 %v191
        %219 = vmatprep.subr.mxu0 0.0
        %220 = vmatpush1.msra.mxu0 %v192
        %221 = vmatprep.subr.mxu0 0.0
        %222 = vmatpush1.msra.mxu0 %v193
        %223 = vmatprep.subr.mxu0 0.0
        %224 = vmatpush1.msra.mxu0 %v194
        %225 = vmatprep.subr.mxu0 0.0
        %226 = vmatpush1.msra.mxu0 %v195
        %227 = vmatprep.subr.mxu0 0.0
        %228 = vmatpush1.msra.mxu0 %v196
        %229 = vmatprep.subr.mxu0 0.0
        %230 = vmatpush1.msra.mxu0 0.0
        %231 = vmatprep.subr.mxu0 0.0
        %232 = vmatpush1.msra.mxu0 0.0
        %233 = vmatprep.subr.mxu0 0.0
        %234 = vmatpush1.msra.mxu0 0.0
        %235 = vmatprep.subr.mxu0 0.0
        %236 = vmatpush1.msra.mxu0 0.0
        %237 = vmatprep.subr.mxu0 0.0
        %238 = vmatpush1.msra.mxu0 0.0
        %239 = vmatprep.subr.mxu0 0.0
        %240 = vmatpush1.msra.mxu0 0.0
        %241 = vmatprep.subr.mxu0 0.0
        %242 = vmatpush1.msra.mxu0 0.0
        %243 = vmatprep.subr.mxu0 0.0
        %244 = vmatpush1.msra.mxu0 0.0
        %245 = vmatprep.subr.mxu0 0.0
        %246 = vmatpush1.msra.mxu0 0.0
        %247 = vmatprep.subr.mxu0 0.0
        %248 = vmatpush1.msra.mxu0 0.0
        %249 = vmatprep.subr.mxu0 0.0
        %250 = vmatpush1.msra.mxu0 0.0
        %251 = vmatprep.subr.mxu0 0.0
        %252 = vmatpush1.msra.mxu0 0.0
        %253 = vmatprep.subr.mxu0 0.0
        %254 = vmatpush1.msra.mxu0 0.0
        %255 = vmatprep.subr.mxu0 0.0
        %256 = vmatpush1.msra.mxu0 0.0
        %257 = vmatprep.subr.mxu0 0.0
        %258 = vmatpush1.msra.mxu0 0.0
        %259 = vmatprep.subr.mxu0 0.0
        %260 = vmatpush1.msra.mxu0 0.0
        %261 = vmatprep.mubr.f32.mxu0 0.0
        %262 = vmatmul.mubr.f32.gmra.mrb[0].mxu0 %v180
        %v263 = vpop.f32.mrb[0].mxu0
        %v264 = vadd.f32 0.0, %v263
        %v265 = vpop.f32.mrb[0].mxu0
        %266 = vdwg.mxu0
        %v267 = vmul.f32 %v264, 2.0
        %v268 = vsub.f32 2.0, %v267
        %v269 = vmax.f32 %v268, 0.0
        %v270 = vrsqrt.pop %v269
        %v271 = vmul.f32 %v269, %v270
        %vm272 = vcmp.eq.f32.partialorder %v269, inf
        %v273 = vsel %vm272, %v269, %v271
        %vm274 = vcmp.eq.f32.partialorder %v269, 0.0
        %v275 = vand.u32 %v269, 2147483648
        %v276 = vsel %vm274, %v275, %v273
        %v277 = vmul.f32 %v276, 0.5
        %v278 = vmin.f32 %v277, 1.0
        %v279 = vmul.f32 %v278, -0.0012624911
        %v280 = vadd.f32 %v279, 0.00667009
        %v281 = vmul.f32 %v280, %v278
        %v282 = vadd.f32 %v281, -0.017088126
        %v283 = vmul.f32 %v282, %v278
        %v284 = vadd.f32 %v283, 0.03089188
        %v285 = vmul.f32 %v284, %v278
        %v286 = vadd.f32 %v285, -0.050174303
        %v287 = vmul.f32 %v286, %v278
        %v288 = vadd.f32 %v287, 0.08897899
        %v289 = vmul.f32 %v288, %v278
        %v290 = vadd.f32 %v289, -0.2145988
        %v291 = vmul.f32 %v290, %v278
        %v292 = vadd.f32 %v291, 1.5707963
        %v293 = vsub.f32 1.0, %v278
        %v294 = vrsqrt.pop %v293
        %v295 = vmul.f32 %v293, %v294
        %vm296 = vcmp.eq.f32.partialorder %v293, inf
        %v297 = vsel %vm296, %v293, %v295
        %vm298 = vcmp.eq.f32.partialorder %v293, 0.0
        %v299 = vand.u32 %v293, 2147483648
        %v300 = vsel %vm298, %v299, %v297
        %v301 = vmul.f32 %v300, %v292
        %v302 = vsub.f32 1.5707964, %v301
        %v303 = vmul.f32 %v302, 2.0
        %v304 = vmul.f32 %v303, %v302
        %v305 = vlaneseq
        %v306 = vand.u32 %v305, 127
        %vm307 = vcmp.lt.s32.totalorder %v306, 8
        %v308 = vsel %vm307, %v304, 0.0
        %309 = vst [vmem:[%s173] sm:$0xff] %v308
        %s310 = sand.u32 %s75, 1
        %s311 = scalar_lea.sflag [#allocation4], %s310
        %s312 = sand.u32 %s75, 1
        %s313 = smul.addr %s312, 8
        %s314 = scalar_lea.vmem [#allocation7], %s313
        // Predicated region
        $region37: #{tpu_custom_call.1} parent=27 // pred_check
          %p315 = pneg %p85
        $region38: #{tpu_custom_call.1} parent=27 // pred_check_branch
          %317 = sbr.rel (%p315) target = $region40
        $region39: #{tpu_custom_call.1} parent=27 // pred_region
          %s319 = ssub.s32 128, 128
          %320 = vsyncadd %s311, %s319
          %s321 = smul.addr %s20, 128
          %s322 = scalar_lea.hbm %s2, %s321
          %s324 = sshll.u32 %s314, 4
          %s325 = int_to_ptr.vmem [resolvable:$true] %s324
          %327 = dma.vmem_to_hbm [thread:$0]  %s325, 128, %s322, %s311
        $region40: #{tpu_custom_call.1} parent=27 // pred_fallthru
          _
      $region28: #{tpu_custom_call.1} parent=5 // pred_fallthru
        _
      %p328 = scmp.le.s32.totalorder 2, %s15
      // Predicated region
      $region41: #{tpu_custom_call.1} parent=5 // pred_check
        %p329 = pneg %p328
      $region42: #{tpu_custom_call.1} parent=5 // pred_check_branch
        %331 = sbr.rel (%p329) target = $region44
      $region43: #{tpu_custom_call.1} parent=5 // pred_region
        %s332 = ssub.s32 %s15, 2
        // Predicated region
        $region45: #{tpu_custom_call.1} parent=43 // pred_check
          %p333 = pneg %p91
        $region46: #{tpu_custom_call.1} parent=43 // pred_check_branch
          %335 = sbr.rel (%p333) target = $region48
        $region47: #{tpu_custom_call.1} parent=43 // pred_region
          %s336 = sand.u32 %s76, 1
          %s337 = scalar_lea.sflag [#allocation4], %s336
          %s338 = sand.u32 %s76, 1
          %s339 = smul.addr %s338, 8
          %s340 = scalar_lea.vmem [#allocation7], %s339
          %341 = dma.done %s337, 128
        $region48: #{tpu_custom_call.1} parent=43 // pred_fallthru
          _
      $region44: #{tpu_custom_call.1} parent=5 // pred_fallthru
        _
    $region6: #{tpu_custom_call.1} parent=1 // loop_footer
      %s19 = sadd.s32 1, %s15
    $region7: #{tpu_custom_call.1} parent=1 // loop_footer_branch
      %14 = sbr.rel target = $region3
    $region8: #{tpu_custom_call.1} parent=1 // loop_exit
      _
    %342 = vsyncpa [#allocation3], 1
    %s343 = scalar_lea.sflag [#allocation3], 1
    %344 = vsyncpa %s343, 1
    %345 = vsyncpa [#allocation6], 1
    %346 = vsyncpa [#allocation4], 1
    %s347 = scalar_lea.sflag [#allocation4], 1
    %348 = vsyncpa %s347, 1

</llo_original>
